<compile_context>
chip_gen: v5e
topology: v5e:2x2
jax: 0.10.0
libtpu: 0.0.40
codegen_flags: <defaults>
</compile_context>

<pallas_src>
import functools

import jax
import jax.numpy as jnp
from jax import lax
from jax.experimental import pallas as pl
from jax.experimental.pallas import tpu as pltpu


def _sigmoid_one_eup(z):
    # sigmoid(z) = 0.5*tanh(0.5*z) + 0.5  -> a single EUP transcendental
    # (vs exp + reciprocal); EUP is the saturating slot at PersonNet sizes.
    return 0.5 * jnp.tanh(0.5 * z) + 0.5


_ACTIVATIONS = {
    "sigmoid": _sigmoid_one_eup,
    "relu": jax.nn.relu,
    "leakyrelu": functools.partial(jax.nn.leaky_relu, negative_slope=0.01),
    "tanh": jnp.tanh,
}


def _round_up(x, m):
    return ((x + m - 1) // m) * m


# ---------------------------------------------------------------------------
# Kernel
# ---------------------------------------------------------------------------
def _make_mlp_head_kernel(n_layers, activation_name, compute_dtype):
    if activation_name not in _ACTIVATIONS:
        raise ValueError(f"unknown activation: {activation_name}")
    act = _ACTIVATIONS[activation_name]

    def kernel(x_ref, *refs):
        # refs = [w0, b0, ..., w_{L-1}, b_{L-1}, w_head, b_head, y_out_ref]
        layer_refs = refs[: 2 * n_layers]
        wh_ref, bh_ref = refs[2 * n_layers], refs[2 * n_layers + 1]
        y_ref = refs[2 * n_layers + 2]

        h = x_ref[...]                           # (TILE_B, F0_pad) f32 from HBM
        if h.dtype != compute_dtype:
            h = h.astype(compute_dtype)          # VPU cast (free-ish), no HBM pass

        for i in range(n_layers):
            w = layer_refs[2 * i][...]           # (in_pad, out_pad) compute_dtype
            b = layer_refs[2 * i + 1][...]       # (1, out_pad) f32
            z = jnp.dot(h, w, preferred_element_type=jnp.float32) + b
            h = act(z)                           # elementwise stays f32
            if h.dtype != compute_dtype:
                h = h.astype(compute_dtype)

        # Scalar head: Linear(hidden, 1) as VPU multiply + lane reduction
        # (avoids a full MXU pass for a single output column), then tanh * 3.
        wh = wh_ref[...]                         # (1, hidden_pad) f32
        z = jnp.sum(h.astype(jnp.float32) * wh, axis=-1, keepdims=True)
        z = z + bh_ref[...]                      # (TILE_B, 1) f32
        y_ref[...] = (jnp.tanh(z) * 3.0).astype(y_ref.dtype)

    return kernel


# ---------------------------------------------------------------------------
# Wrapper
# ---------------------------------------------------------------------------
def personnet_forward(x, layer_params, head, activation="sigmoid", *,
                      tile_b=None, mxu_dtype=jnp.bfloat16):
    """layer_params: list of (W, b), W shape (out, in), b shape (out,)  (PyTorch).
       head: (W, b) with W shape (1, hidden).
       tile_b: batch tile per grid step (None = auto: ~1024, VMEM-bounded).
       mxu_dtype: matmul-input dtype (default bf16; f32 accumulation either way)."""
    x = jnp.asarray(x, jnp.float32)
    B, num_items = x.shape
    n_layers = len(layer_params)
    compute_dtype = jnp.dtype(mxu_dtype)

    # ---- Pad every feature dim up to a multiple of 128 (full lanes / MXU). ----
    dims = [num_items] + [jnp.asarray(w).shape[0] for (w, _) in layer_params]
    dims_pad = [_round_up(d, 128) for d in dims]
    F0 = dims_pad[0]

    flat_params = []
    for li, (w, b) in enumerate(layer_params):
        in_p, out_p = dims_pad[li], dims_pad[li + 1]
        w = jnp.asarray(w, jnp.float32).T                        # (in, out)
        w = jnp.pad(w, ((0, in_p - w.shape[0]), (0, out_p - w.shape[1])))
        b = jnp.asarray(b, jnp.float32).reshape(1, -1)
        b = jnp.pad(b, ((0, 0), (0, out_p - b.shape[1])))
        flat_params += [w.astype(compute_dtype), b]              # bias stays f32
    wh, bh = head
    wh = jnp.asarray(wh, jnp.float32).reshape(1, -1)             # (1, hidden)
    wh = jnp.pad(wh, ((0, 0), (0, dims_pad[-1] - wh.shape[1]))) # stays f32 (tiny)
    flat_params += [wh, jnp.asarray(bh, jnp.float32).reshape(1, 1)]

    param_bytes = sum(int(p.size) * p.dtype.itemsize for p in flat_params)

    # ---- Generation-aware VMEM capacity. ----
    try:
        vmem_cap = int(pltpu.get_tpu_info().vmem_capacity_bytes)
    except Exception:                       # pragma: no cover - conservative v7x
        vmem_cap = 64 * 2**20

    # ---- Batch-tile selection: large tiles amortize ~0.35us/step, bounded by
    #      VMEM; keep >=2 grid steps when the batch allows so the "parallel"
    #      axis actually splits across v7x's two TensorCores. ----
    B8 = _round_up(B, 8)
    if tile_b is None:
        tile_b = 1024
    budget = max(vmem_cap - 8 * 2**20, 16 * 2**20)
    avail_x = max(budget - 2 * param_bytes, 2 * 2**20)
    max_tb_vmem = max(8, (avail_x // (2 * (F0 * 4 + 4)) // 8) * 8)
    tb = max(8, min(_round_up(tile_b, 8), B8, max_tb_vmem))
    if B8 // tb < 2 and B8 >= 16:
        tb = max(8, _round_up(-(-B8 // 2), 8))
    B_pad = _round_up(B8, tb)
    n_tiles = B_pad // tb

    # ---- VMEM limit: resident params (x2 in case of buffer fallback) + the
    #      double-buffered streaming x/y tiles + margin, clamped below the
    #      physical capacity so Mosaic keeps scratch headroom. ----
    tile_bytes = tb * F0 * 4 + tb * 4
    vmem_needed = 2 * param_bytes + 2 * tile_bytes + (4 << 20)
    vmem_limit = int(min(max(vmem_needed, 32 * 2**20), vmem_cap - 8 * 2**20))

    # ---- x: only materialize a padded copy when actually needed. ----
    if B_pad != B or F0 != num_items:
        x_in = jnp.pad(x, ((0, B_pad - B), (0, F0 - num_items)))
    else:
        x_in = x

    # ---- Advisory cost estimate so XLA schedules around the custom call. ----
    flops, trans = 0, 0
    prev = dims_pad[0]
    for d in dims_pad[1:]:
        flops += 2 * B_pad * prev * d
        trans += B_pad * d                    # one activation per hidden unit
        prev = d
    flops += 2 * B_pad * prev                 # head reduce
    trans += B_pad                            # tanh head
    bytes_accessed = int(x_in.size) * 4 + param_bytes + B_pad * 4
    cost = pl.CostEstimate(flops=flops, transcendentals=trans,
                           bytes_accessed=bytes_accessed)

    kernel = _make_mlp_head_kernel(n_layers, activation, compute_dtype)
    x_spec = pl.BlockSpec((tb, F0), lambda i: (i, 0))
    y_spec = pl.BlockSpec((tb, 1), lambda i: (i, 0))

    def _build_and_call(single_buffer_params):
        if single_buffer_params:
            # Constant index_map + single buffer: weights resident exactly once.
            param_specs = [pl.BlockSpec(p.shape, lambda i: (0, 0),
                                        pipeline_mode=pl.Buffered(1))
                           for p in flat_params]
        else:
            param_specs = [pl.BlockSpec(p.shape, lambda i: (0, 0))
                           for p in flat_params]
        return pl.pallas_call(
            kernel,
            out_shape=jax.ShapeDtypeStruct((B_pad, 1), jnp.float32),
            grid=(n_tiles,),
            in_specs=[x_spec] + param_specs,
            out_specs=y_spec,
            compiler_params=pltpu.CompilerParams(
                dimension_semantics=("parallel",),
                vmem_limit_bytes=vmem_limit,
            ),
            cost_estimate=cost,
        )(x_in, *flat_params)

    try:
        y_full = _build_and_call(True)
    except Exception:
        # Fallback: default double-buffered invariant weights (still correct).
        y_full = _build_and_call(False)

    # ---- BatchNorm1d(1, eps=0, momentum=0, affine=False), training-mode batch
    #      statistics over the *real* rows only (padded rows sliced off).
    #      Done in plain JAX: a second pallas_call launch costs more than the
    #      math.  eps=0 => var==0 (e.g. B==1) yields inf/NaN, as in PyTorch. ----
    y = y_full[:B]
    mean = jnp.mean(y, axis=0, keepdims=True)
    centered = y - mean
    var = jnp.mean(centered * centered, axis=0, keepdims=True)   # biased var
    return centered * lax.rsqrt(var)


# ---------------------------------------------------------------------------
# Deterministic parameter construction (matches PersonNet.__init__ shapes)
# ---------------------------------------------------------------------------
def build_personnet_params(key, num_items, depth, hidden_dim):
    def linear_init(key, out_f, in_f):
        kw, kb = jax.random.split(key)
        bound = float(1.0 / (in_f ** 0.5))
        w = jax.random.uniform(kw, (out_f, in_f), jnp.float32, -bound, bound)
        b = jax.random.uniform(kb, (out_f,), jnp.float32, -bound, bound)
        return w, b

    n_keys = 2 + 2 * ((depth - 1) // 2)
    keys = jax.random.split(key, n_keys)
    k = 0
    layers = [linear_init(keys[k], hidden_dim, num_items)]; k += 1
    for _ in range((depth - 1) // 2):
        layers.append(linear_init(keys[k], hidden_dim * 2, hidden_dim)); k += 1
        layers.append(linear_init(keys[k], hidden_dim, hidden_dim * 2)); k += 1
    head = linear_init(keys[k], 1, hidden_dim); k += 1
    return layers, head


def personnet_reference(x, layer_params, head, activation="sigmoid",
                        matmul_dtype=jnp.float32):
    """Pure-JAX reference mirroring the kernel's dtype handling:
       matmul inputs in `matmul_dtype`, f32 accumulation / elementwise."""
    act = _ACTIVATIONS[activation]
    h = jnp.asarray(x, jnp.float32)
    for w, b in layer_params:
        wt = jnp.asarray(w, jnp.float32).T
        z = jnp.dot(h.astype(matmul_dtype), wt.astype(matmul_dtype),
                    preferred_element_type=jnp.float32,
                    precision=lax.Precision.HIGHEST) + b
        h = act(z)
    wh = jnp.asarray(head[0], jnp.float32).reshape(-1)
    hv = h.astype(matmul_dtype).astype(jnp.float32)
    z = jnp.sum(hv * wh, axis=-1, keepdims=True) + head[1]
    y = jnp.tanh(z) * 3.0
    mean = jnp.mean(y, axis=0, keepdims=True)
    var = jnp.mean((y - mean) ** 2, axis=0, keepdims=True)       # biased, eps=0
    return (y - mean) * lax.rsqrt(var)


if __name__ == "__main__":
    # Small shapes consistent with the module: batch=8, num_items=32,
    # hidden_dim=32, depth=3 (exercises the extra hidden-layer pair).
    NUM_ITEMS, DEPTH, HIDDEN, BATCH = 32, 3, 32, 8

    key = jax.random.PRNGKey(0)
    kx, kp = jax.random.split(key)
    x = jax.random.normal(kx, (BATCH, NUM_ITEMS), jnp.float32)
    layers, head = build_personnet_params(kp, NUM_ITEMS, DEPTH, HIDDEN)

    # Default path: bf16 MXU inputs, f32 accumulation.  Compare against a
    # bf16-quantized reference (outputs are O(1) after BatchNorm).
    out_bf16 = jax.block_until_ready(
        personnet_forward(x, layers, head, activation="sigmoid"))
    ref_bf16 = personnet_reference(x, layers, head, activation="sigmoid",
                                   matmul_dtype=jnp.bfloat16)
    assert out_bf16.shape == (BATCH, 1)
    assert jnp.allclose(out_bf16, ref_bf16, atol=2e-2, rtol=2e-2), (
        float(jnp.max(jnp.abs(out_bf16 - ref_bf16))))

    # Full-f32 MXU path against the f32 reference.
    out_f32 = jax.block_until_ready(
        personnet_forward(x, layers, head, activation="sigmoid",
                          mxu_dtype=jnp.float32))
    ref_f32 = personnet_reference(x, layers, head, activation="sigmoid")
    assert jnp.allclose(out_f32, ref_f32, atol=2e-2, rtol=2e-2), (
        float(jnp.max(jnp.abs(out_f32 - ref_f32))))

    print("KERNEL_OK")
</pallas_src>

<mosaic_0001>
module attributes {stable_mosaic.version = 11 : i64} {
  func.func @kernel(%arg0: i32, %arg1: memref<8x128xf32, #tpu.memory_space<vmem>>, %arg2: memref<128x128xbf16, #tpu.memory_space<vmem>>, %arg3: memref<1x128xf32, #tpu.memory_space<vmem>>, %arg4: memref<128x128xbf16, #tpu.memory_space<vmem>>, %arg5: memref<1x128xf32, #tpu.memory_space<vmem>>, %arg6: memref<128x128xbf16, #tpu.memory_space<vmem>>, %arg7: memref<1x128xf32, #tpu.memory_space<vmem>>, %arg8: memref<1x128xf32, #tpu.memory_space<vmem>>, %arg9: memref<1x1xf32, #tpu.memory_space<vmem>>, %arg10: memref<8x1xf32, #tpu.memory_space<vmem>>) attributes {dimension_semantics = [#tpu.dimension_semantics<parallel>], iteration_bounds = array<i64: 1>, scalar_prefetch = 0 : i64, scratch_operands = 0 : i64, tpu.core_type = #tpu.core_type<tc>, window_params = [{transform_indices = @transform_0, window_bounds = array<i64: 8, 128>}, {pipeline_mode = #tpu.pipeline_mode<synchronous>, transform_indices = @transform_1, window_bounds = array<i64: 128, 128>}, {pipeline_mode = #tpu.pipeline_mode<synchronous>, transform_indices = @transform_2, window_bounds = array<i64: 1, 128>}, {pipeline_mode = #tpu.pipeline_mode<synchronous>, transform_indices = @transform_3, window_bounds = array<i64: 128, 128>}, {pipeline_mode = #tpu.pipeline_mode<synchronous>, transform_indices = @transform_4, window_bounds = array<i64: 1, 128>}, {pipeline_mode = #tpu.pipeline_mode<synchronous>, transform_indices = @transform_5, window_bounds = array<i64: 128, 128>}, {pipeline_mode = #tpu.pipeline_mode<synchronous>, transform_indices = @transform_6, window_bounds = array<i64: 1, 128>}, {pipeline_mode = #tpu.pipeline_mode<synchronous>, transform_indices = @transform_7, window_bounds = array<i64: 1, 128>}, {pipeline_mode = #tpu.pipeline_mode<synchronous>, transform_indices = @transform_8, window_bounds = array<i64: 1, 1>}, {transform_indices = @transform_9, window_bounds = array<i64: 8, 1>}]} {
    %c0 = arith.constant 0 : index
    %c0_0 = arith.constant 0 : index
    %0 = vector.load %arg1[%c0, %c0_0] : memref<8x128xf32, #tpu.memory_space<vmem>>, vector<8x128xf32>
    %1 = arith.truncf %0 : vector<8x128xf32> to vector<8x128xbf16>
    %c0_1 = arith.constant 0 : index
    %c0_2 = arith.constant 0 : index
    %2 = vector.load %arg2[%c0_1, %c0_2] : memref<128x128xbf16, #tpu.memory_space<vmem>>, vector<128x128xbf16>
    %c0_3 = arith.constant 0 : index
    %c0_4 = arith.constant 0 : index
    %3 = vector.load %arg3[%c0_3, %c0_4] : memref<1x128xf32, #tpu.memory_space<vmem>>, vector<1x128xf32>
    %cst = arith.constant dense<0.000000e+00> : vector<8x128xf32>
    %4 = tpu.matmul %1, %2, %cst {dimension_numbers = #tpu.dot_dimension_numbers<[1], [0], [0], [1], [0, 0, 1, 1], [], []>} : vector<8x128xbf16>, vector<128x128xbf16>, vector<8x128xf32> -> vector<8x128xf32>
    %5 = vector.broadcast %3 : vector<1x128xf32> to vector<8x128xf32>
    %6 = arith.addf %4, %5 : vector<8x128xf32>
    %cst_5 = arith.constant 5.000000e-01 : f32
    %7 = vector.broadcast %cst_5 : f32 to vector<8x128xf32>
    %8 = arith.mulf %7, %6 : vector<8x128xf32>
    %9 = math.tanh %8 : vector<8x128xf32>
    %cst_6 = arith.constant 5.000000e-01 : f32
    %10 = vector.broadcast %cst_6 : f32 to vector<8x128xf32>
    %11 = arith.mulf %10, %9 : vector<8x128xf32>
    %cst_7 = arith.constant 5.000000e-01 : f32
    %12 = vector.broadcast %cst_7 : f32 to vector<8x128xf32>
    %13 = arith.addf %11, %12 : vector<8x128xf32>
    %14 = arith.truncf %13 : vector<8x128xf32> to vector<8x128xbf16>
    %c0_8 = arith.constant 0 : index
    %c0_9 = arith.constant 0 : index
    %15 = vector.load %arg4[%c0_8, %c0_9] : memref<128x128xbf16, #tpu.memory_space<vmem>>, vector<128x128xbf16>
    %c0_10 = arith.constant 0 : index
    %c0_11 = arith.constant 0 : index
    %16 = vector.load %arg5[%c0_10, %c0_11] : memref<1x128xf32, #tpu.memory_space<vmem>>, vector<1x128xf32>
    %cst_12 = arith.constant dense<0.000000e+00> : vector<8x128xf32>
    %17 = tpu.matmul %14, %15, %cst_12 {dimension_numbers = #tpu.dot_dimension_numbers<[1], [0], [0], [1], [0, 0, 1, 1], [], []>} : vector<8x128xbf16>, vector<128x128xbf16>, vector<8x128xf32> -> vector<8x128xf32>
    %18 = vector.broadcast %16 : vector<1x128xf32> to vector<8x128xf32>
    %19 = arith.addf %17, %18 : vector<8x128xf32>
    %cst_13 = arith.constant 5.000000e-01 : f32
    %20 = vector.broadcast %cst_13 : f32 to vector<8x128xf32>
    %21 = arith.mulf %20, %19 : vector<8x128xf32>
    %22 = math.tanh %21 : vector<8x128xf32>
    %cst_14 = arith.constant 5.000000e-01 : f32
    %23 = vector.broadcast %cst_14 : f32 to vector<8x128xf32>
    %24 = arith.mulf %23, %22 : vector<8x128xf32>
    %cst_15 = arith.constant 5.000000e-01 : f32
    %25 = vector.broadcast %cst_15 : f32 to vector<8x128xf32>
    %26 = arith.addf %24, %25 : vector<8x128xf32>
    %27 = arith.truncf %26 : vector<8x128xf32> to vector<8x128xbf16>
    %c0_16 = arith.constant 0 : index
    %c0_17 = arith.constant 0 : index
    %28 = vector.load %arg6[%c0_16, %c0_17] : memref<128x128xbf16, #tpu.memory_space<vmem>>, vector<128x128xbf16>
    %c0_18 = arith.constant 0 : index
    %c0_19 = arith.constant 0 : index
    %29 = vector.load %arg7[%c0_18, %c0_19] : memref<1x128xf32, #tpu.memory_space<vmem>>, vector<1x128xf32>
    %cst_20 = arith.constant dense<0.000000e+00> : vector<8x128xf32>
    %30 = tpu.matmul %27, %28, %cst_20 {dimension_numbers = #tpu.dot_dimension_numbers<[1], [0], [0], [1], [0, 0, 1, 1], [], []>} : vector<8x128xbf16>, vector<128x128xbf16>, vector<8x128xf32> -> vector<8x128xf32>
    %31 = vector.broadcast %29 : vector<1x128xf32> to vector<8x128xf32>
    %32 = arith.addf %30, %31 : vector<8x128xf32>
    %cst_21 = arith.constant 5.000000e-01 : f32
    %33 = vector.broadcast %cst_21 : f32 to vector<8x128xf32>
    %34 = arith.mulf %33, %32 : vector<8x128xf32>
    %35 = math.tanh %34 : vector<8x128xf32>
    %cst_22 = arith.constant 5.000000e-01 : f32
    %36 = vector.broadcast %cst_22 : f32 to vector<8x128xf32>
    %37 = arith.mulf %36, %35 : vector<8x128xf32>
    %cst_23 = arith.constant 5.000000e-01 : f32
    %38 = vector.broadcast %cst_23 : f32 to vector<8x128xf32>
    %39 = arith.addf %37, %38 : vector<8x128xf32>
    %40 = arith.truncf %39 : vector<8x128xf32> to vector<8x128xbf16>
    %c0_24 = arith.constant 0 : index
    %c0_25 = arith.constant 0 : index
    %41 = vector.load %arg8[%c0_24, %c0_25] : memref<1x128xf32, #tpu.memory_space<vmem>>, vector<1x128xf32>
    %42 = arith.extf %40 : vector<8x128xbf16> to vector<8x128xf32>
    %43 = vector.broadcast %41 : vector<1x128xf32> to vector<8x128xf32>
    %44 = arith.mulf %42, %43 : vector<8x128xf32>
    %cst_26 = arith.constant dense<0.000000e+00> : vector<8xf32>
    %45 = vector.multi_reduction <add>, %44, %cst_26 [1] : vector<8x128xf32> to vector<8xf32>
    %46 = vector.shape_cast %45 : vector<8xf32> to vector<8x1xf32>
    %c0_27 = arith.constant 0 : index
    %c0_28 = arith.constant 0 : index
    %47 = vector.load %arg9[%c0_27, %c0_28] : memref<1x1xf32, #tpu.memory_space<vmem>>, vector<1x1xf32>
    %48 = vector.broadcast %47 : vector<1x1xf32> to vector<8x1xf32>
    %49 = arith.addf %46, %48 : vector<8x1xf32>
    %50 = math.tanh %49 : vector<8x1xf32>
    %cst_29 = arith.constant 3.000000e+00 : f32
    %51 = vector.broadcast %cst_29 : f32 to vector<8x1xf32>
    %52 = arith.mulf %50, %51 : vector<8x1xf32>
    %c0_30 = arith.constant 0 : index
    %c0_31 = arith.constant 0 : index
    %53 = vector.load %arg10[%c0_30, %c0_31] : memref<8x1xf32, #tpu.memory_space<vmem>>, vector<8x1xf32>
    tpu.vector_store %arg10[%c0_30, %c0_31], %52 {strides = array<i32>} : memref<8x1xf32, #tpu.memory_space<vmem>>, vector<8x1xf32>,
    return
  }
  func.func @transform_0(%arg0: i32) -> (i32, i32) {
    %c0_i32 = arith.constant 0 : i32
    %c0_i32_0 = arith.constant 0 : i32
    return %arg0, %c0_i32 : i32, i32
  }
  func.func @transform_1(%arg0: i32) -> (i32, i32) {
    %c0_i32 = arith.constant 0 : i32
    %c0_i32_0 = arith.constant 0 : i32
    %c0_i32_1 = arith.constant 0 : i32
    return %c0_i32, %c0_i32_0 : i32, i32
  }
  func.func @transform_2(%arg0: i32) -> (i32, i32) {
    %c0_i32 = arith.constant 0 : i32
    %c0_i32_0 = arith.constant 0 : i32
    %c0_i32_1 = arith.constant 0 : i32
    return %c0_i32, %c0_i32_0 : i32, i32
  }
  func.func @transform_3(%arg0: i32) -> (i32, i32) {
    %c0_i32 = arith.constant 0 : i32
    %c0_i32_0 = arith.constant 0 : i32
    %c0_i32_1 = arith.constant 0 : i32
    return %c0_i32, %c0_i32_0 : i32, i32
  }
  func.func @transform_4(%arg0: i32) -> (i32, i32) {
    %c0_i32 = arith.constant 0 : i32
    %c0_i32_0 = arith.constant 0 : i32
    %c0_i32_1 = arith.constant 0 : i32
    return %c0_i32, %c0_i32_0 : i32, i32
  }
  func.func @transform_5(%arg0: i32) -> (i32, i32) {
    %c0_i32 = arith.constant 0 : i32
    %c0_i32_0 = arith.constant 0 : i32
    %c0_i32_1 = arith.constant 0 : i32
    return %c0_i32, %c0_i32_0 : i32, i32
  }
  func.func @transform_6(%arg0: i32) -> (i32, i32) {
    %c0_i32 = arith.constant 0 : i32
    %c0_i32_0 = arith.constant 0 : i32
    %c0_i32_1 = arith.constant 0 : i32
    return %c0_i32, %c0_i32_0 : i32, i32
  }
  func.func @transform_7(%arg0: i32) -> (i32, i32) {
    %c0_i32 = arith.constant 0 : i32
    %c0_i32_0 = arith.constant 0 : i32
    %c0_i32_1 = arith.constant 0 : i32
    return %c0_i32, %c0_i32_0 : i32, i32
  }
  func.func @transform_8(%arg0: i32) -> (i32, i32) {
    %c0_i32 = arith.constant 0 : i32
    %c0_i32_0 = arith.constant 0 : i32
    %c0_i32_1 = arith.constant 0 : i32
    return %c0_i32, %c0_i32_0 : i32, i32
  }
  func.func @transform_9(%arg0: i32) -> (i32, i32) {
    %c0_i32 = arith.constant 0 : i32
    %c0_i32_0 = arith.constant 0 : i32
    return %arg0, %c0_i32 : i32, i32
  }
}

module attributes {stable_mosaic.version = 11 : i64} {
  func.func @kernel(%arg0: i32, %arg1: memref<8x128xf32, #tpu.memory_space<vmem>>, %arg2: memref<128x128xbf16, #tpu.memory_space<vmem>>, %arg3: memref<1x128xf32, #tpu.memory_space<vmem>>, %arg4: memref<128x128xbf16, #tpu.memory_space<vmem>>, %arg5: memref<1x128xf32, #tpu.memory_space<vmem>>, %arg6: memref<128x128xbf16, #tpu.memory_space<vmem>>, %arg7: memref<1x128xf32, #tpu.memory_space<vmem>>, %arg8: memref<1x128xf32, #tpu.memory_space<vmem>>, %arg9: memref<1x1xf32, #tpu.memory_space<vmem>>, %arg10: memref<8x1xf32, #tpu.memory_space<vmem>>) attributes {dimension_semantics = [#tpu.dimension_semantics<parallel>], iteration_bounds = array<i64: 1>, scalar_prefetch = 0 : i64, scratch_operands = 0 : i64, tpu.core_type = #tpu.core_type<tc>, window_params = [{transform_indices = @transform_0, window_bounds = array<i64: 8, 128>}, {pipeline_mode = #tpu.pipeline_mode<synchronous>, transform_indices = @transform_1, window_bounds = array<i64: 128, 128>}, {pipeline_mode = #tpu.pipeline_mode<synchronous>, transform_indices = @transform_2, window_bounds = array<i64: 1, 128>}, {pipeline_mode = #tpu.pipeline_mode<synchronous>, transform_indices = @transform_3, window_bounds = array<i64: 128, 128>}, {pipeline_mode = #tpu.pipeline_mode<synchronous>, transform_indices = @transform_4, window_bounds = array<i64: 1, 128>}, {pipeline_mode = #tpu.pipeline_mode<synchronous>, transform_indices = @transform_5, window_bounds = array<i64: 128, 128>}, {pipeline_mode = #tpu.pipeline_mode<synchronous>, transform_indices = @transform_6, window_bounds = array<i64: 1, 128>}, {pipeline_mode = #tpu.pipeline_mode<synchronous>, transform_indices = @transform_7, window_bounds = array<i64: 1, 128>}, {pipeline_mode = #tpu.pipeline_mode<synchronous>, transform_indices = @transform_8, window_bounds = array<i64: 1, 1>}, {transform_indices = @transform_9, window_bounds = array<i64: 8, 1>}]} {
    %c0 = arith.constant 0 : index
    %c0_0 = arith.constant 0 : index
    %0 = vector.load %arg1[%c0, %c0_0] : memref<8x128xf32, #tpu.memory_space<vmem>>, vector<8x128xf32>
    %1 = arith.truncf %0 : vector<8x128xf32> to vector<8x128xbf16>
    %c0_1 = arith.constant 0 : index
    %c0_2 = arith.constant 0 : index
    %2 = vector.load %arg2[%c0_1, %c0_2] : memref<128x128xbf16, #tpu.memory_space<vmem>>, vector<128x128xbf16>
    %c0_3 = arith.constant 0 : index
    %c0_4 = arith.constant 0 : index
    %3 = vector.load %arg3[%c0_3, %c0_4] : memref<1x128xf32, #tpu.memory_space<vmem>>, vector<1x128xf32>
    %cst = arith.constant dense<0.000000e+00> : vector<8x128xf32>
    %4 = tpu.matmul %1, %2, %cst {dimension_numbers = #tpu.dot_dimension_numbers<[1], [0], [0], [1], [0, 0, 1, 1], [], []>} : vector<8x128xbf16>, vector<128x128xbf16>, vector<8x128xf32> -> vector<8x128xf32>
    %5 = vector.broadcast %3 : vector<1x128xf32> to vector<8x128xf32>
    %6 = arith.addf %4, %5 : vector<8x128xf32>
    %cst_5 = arith.constant 5.000000e-01 : f32
    %7 = vector.broadcast %cst_5 : f32 to vector<8x128xf32>
    %8 = arith.mulf %7, %6 : vector<8x128xf32>
    %9 = math.tanh %8 : vector<8x128xf32>
    %cst_6 = arith.constant 5.000000e-01 : f32
    %10 = vector.broadcast %cst_6 : f32 to vector<8x128xf32>
    %11 = arith.mulf %10, %9 : vector<8x128xf32>
    %cst_7 = arith.constant 5.000000e-01 : f32
    %12 = vector.broadcast %cst_7 : f32 to vector<8x128xf32>
    %13 = arith.addf %11, %12 : vector<8x128xf32>
    %14 = arith.truncf %13 : vector<8x128xf32> to vector<8x128xbf16>
    %c0_8 = arith.constant 0 : index
    %c0_9 = arith.constant 0 : index
    %15 = vector.load %arg4[%c0_8, %c0_9] : memref<128x128xbf16, #tpu.memory_space<vmem>>, vector<128x128xbf16>
    %c0_10 = arith.constant 0 : index
    %c0_11 = arith.constant 0 : index
    %16 = vector.load %arg5[%c0_10, %c0_11] : memref<1x128xf32, #tpu.memory_space<vmem>>, vector<1x128xf32>
    %cst_12 = arith.constant dense<0.000000e+00> : vector<8x128xf32>
    %17 = tpu.matmul %14, %15, %cst_12 {dimension_numbers = #tpu.dot_dimension_numbers<[1], [0], [0], [1], [0, 0, 1, 1], [], []>} : vector<8x128xbf16>, vector<128x128xbf16>, vector<8x128xf32> -> vector<8x128xf32>
    %18 = vector.broadcast %16 : vector<1x128xf32> to vector<8x128xf32>
    %19 = arith.addf %17, %18 : vector<8x128xf32>
    %cst_13 = arith.constant 5.000000e-01 : f32
    %20 = vector.broadcast %cst_13 : f32 to vector<8x128xf32>
    %21 = arith.mulf %20, %19 : vector<8x128xf32>
    %22 = math.tanh %21 : vector<8x128xf32>
    %cst_14 = arith.constant 5.000000e-01 : f32
    %23 = vector.broadcast %cst_14 : f32 to vector<8x128xf32>
    %24 = arith.mulf %23, %22 : vector<8x128xf32>
    %cst_15 = arith.constant 5.000000e-01 : f32
    %25 = vector.broadcast %cst_15 : f32 to vector<8x128xf32>
    %26 = arith.addf %24, %25 : vector<8x128xf32>
    %27 = arith.truncf %26 : vector<8x128xf32> to vector<8x128xbf16>
    %c0_16 = arith.constant 0 : index
    %c0_17 = arith.constant 0 : index
    %28 = vector.load %arg6[%c0_16, %c0_17] : memref<128x128xbf16, #tpu.memory_space<vmem>>, vector<128x128xbf16>
    %c0_18 = arith.constant 0 : index
    %c0_19 = arith.constant 0 : index
    %29 = vector.load %arg7[%c0_18, %c0_19] : memref<1x128xf32, #tpu.memory_space<vmem>>, vector<1x128xf32>
    %cst_20 = arith.constant dense<0.000000e+00> : vector<8x128xf32>
    %30 = tpu.matmul %27, %28, %cst_20 {dimension_numbers = #tpu.dot_dimension_numbers<[1], [0], [0], [1], [0, 0, 1, 1], [], []>} : vector<8x128xbf16>, vector<128x128xbf16>, vector<8x128xf32> -> vector<8x128xf32>
    %31 = vector.broadcast %29 : vector<1x128xf32> to vector<8x128xf32>
    %32 = arith.addf %30, %31 : vector<8x128xf32>
    %cst_21 = arith.constant 5.000000e-01 : f32
    %33 = vector.broadcast %cst_21 : f32 to vector<8x128xf32>
    %34 = arith.mulf %33, %32 : vector<8x128xf32>
    %35 = math.tanh %34 : vector<8x128xf32>
    %cst_22 = arith.constant 5.000000e-01 : f32
    %36 = vector.broadcast %cst_22 : f32 to vector<8x128xf32>
    %37 = arith.mulf %36, %35 : vector<8x128xf32>
    %cst_23 = arith.constant 5.000000e-01 : f32
    %38 = vector.broadcast %cst_23 : f32 to vector<8x128xf32>
    %39 = arith.addf %37, %38 : vector<8x128xf32>
    %40 = arith.truncf %39 : vector<8x128xf32> to vector<8x128xbf16>
    %c0_24 = arith.constant 0 : index
    %c0_25 = arith.constant 0 : index
    %41 = vector.load %arg8[%c0_24, %c0_25] : memref<1x128xf32, #tpu.memory_space<vmem>>, vector<1x128xf32>
    %42 = arith.extf %40 : vector<8x128xbf16> to vector<8x128xf32>
    %43 = vector.broadcast %41 : vector<1x128xf32> to vector<8x128xf32>
    %44 = arith.mulf %42, %43 : vector<8x128xf32>
    %cst_26 = arith.constant dense<0.000000e+00> : vector<8xf32>
    %45 = vector.multi_reduction <add>, %44, %cst_26 [1] : vector<8x128xf32> to vector<8xf32>
    %46 = vector.shape_cast %45 : vector<8xf32> to vector<8x1xf32>
    %c0_27 = arith.constant 0 : index
    %c0_28 = arith.constant 0 : index
    %47 = vector.load %arg9[%c0_27, %c0_28] : memref<1x1xf32, #tpu.memory_space<vmem>>, vector<1x1xf32>
    %48 = vector.broadcast %47 : vector<1x1xf32> to vector<8x1xf32>
    %49 = arith.addf %46, %48 : vector<8x1xf32>
    %50 = math.tanh %49 : vector<8x1xf32>
    %cst_29 = arith.constant 3.000000e+00 : f32
    %51 = vector.broadcast %cst_29 : f32 to vector<8x1xf32>
    %52 = arith.mulf %50, %51 : vector<8x1xf32>
    %c0_30 = arith.constant 0 : index
    %c0_31 = arith.constant 0 : index
    %53 = vector.load %arg10[%c0_30, %c0_31] : memref<8x1xf32, #tpu.memory_space<vmem>>, vector<8x1xf32>
    tpu.vector_store %arg10[%c0_30, %c0_31], %52 {strides = array<i32>} : memref<8x1xf32, #tpu.memory_space<vmem>>, vector<8x1xf32>,
    return
  }
  func.func @transform_0(%arg0: i32) -> (i32, i32) {
    %c0_i32 = arith.constant 0 : i32
    %c0_i32_0 = arith.constant 0 : i32
    return %arg0, %c0_i32 : i32, i32
  }
  func.func @transform_1(%arg0: i32) -> (i32, i32) {
    %c0_i32 = arith.constant 0 : i32
    %c0_i32_0 = arith.constant 0 : i32
    %c0_i32_1 = arith.constant 0 : i32
    return %c0_i32, %c0_i32_0 : i32, i32
  }
  func.func @transform_2(%arg0: i32) -> (i32, i32) {
    %c0_i32 = arith.constant 0 : i32
    %c0_i32_0 = arith.constant 0 : i32
    %c0_i32_1 = arith.constant 0 : i32
    return %c0_i32, %c0_i32_0 : i32, i32
  }
  func.func @transform_3(%arg0: i32) -> (i32, i32) {
    %c0_i32 = arith.constant 0 : i32
    %c0_i32_0 = arith.constant 0 : i32
    %c0_i32_1 = arith.constant 0 : i32
    return %c0_i32, %c0_i32_0 : i32, i32
  }
  func.func @transform_4(%arg0: i32) -> (i32, i32) {
    %c0_i32 = arith.constant 0 : i32
    %c0_i32_0 = arith.constant 0 : i32
    %c0_i32_1 = arith.constant 0 : i32
    return %c0_i32, %c0_i32_0 : i32, i32
  }
  func.func @transform_5(%arg0: i32) -> (i32, i32) {
    %c0_i32 = arith.constant 0 : i32
    %c0_i32_0 = arith.constant 0 : i32
    %c0_i32_1 = arith.constant 0 : i32
    return %c0_i32, %c0_i32_0 : i32, i32
  }
  func.func @transform_6(%arg0: i32) -> (i32, i32) {
    %c0_i32 = arith.constant 0 : i32
    %c0_i32_0 = arith.constant 0 : i32
    %c0_i32_1 = arith.constant 0 : i32
    return %c0_i32, %c0_i32_0 : i32, i32
  }
  func.func @transform_7(%arg0: i32) -> (i32, i32) {
    %c0_i32 = arith.constant 0 : i32
    %c0_i32_0 = arith.constant 0 : i32
    %c0_i32_1 = arith.constant 0 : i32
    return %c0_i32, %c0_i32_0 : i32, i32
  }
  func.func @transform_8(%arg0: i32) -> (i32, i32) {
    %c0_i32 = arith.constant 0 : i32
    %c0_i32_0 = arith.constant 0 : i32
    %c0_i32_1 = arith.constant 0 : i32
    return %c0_i32, %c0_i32_0 : i32, i32
  }
  func.func @transform_9(%arg0: i32) -> (i32, i32) {
    %c0_i32 = arith.constant 0 : i32
    %c0_i32_0 = arith.constant 0 : i32
    return %arg0, %c0_i32 : i32, i32
  }
}

</mosaic_0001>

<llo_original>
// kernel: tpu_custom_call.1
$region0: #{tpu_custom_call.1}
  #allocation0 [shape = 'u32[]', space=smem, size = 0x4, offset = 0x4, fixed_abs, tag = 'smem constant byte address 0x4 - core index']
  #allocation1 [shape = 'u32[72,128]{1,0:T(1,128)}', space=vmem, size = 0x9000, scoped, tag = 'internal scratch']
  #allocation2 [shape = 'f32[1,1]{1,0:T(1,128)S(1)}', space=vmem, size = 0x200, scoped, tag = 'scoped memory for tpu_custom_call.1']
  %s0 = inlined_call_operand.hbm [shape: f32[8,128], index: 0, kind: input, shape index: {}]
  %s1 = inlined_call_operand.hbm [shape: bf16[128,128], index: 1, kind: input, shape index: {}]
  %s2 = inlined_call_operand.vmem [shape: f32[1,128], index: 2, kind: input, shape index: {}]
  %s3 = inlined_call_operand.hbm [shape: bf16[128,128], index: 3, kind: input, shape index: {}]
  %s4 = inlined_call_operand.vmem [shape: f32[1,128], index: 4, kind: input, shape index: {}]
  %s5 = inlined_call_operand.hbm [shape: bf16[128,128], index: 5, kind: input, shape index: {}]
  %s6 = inlined_call_operand.vmem [shape: f32[1,128], index: 6, kind: input, shape index: {}]
  %s7 = inlined_call_operand.vmem [shape: f32[1,128], index: 7, kind: input, shape index: {}]
  %s8 = inlined_call_operand.<no memory space> [shape: f32[1,1], index: 8, kind: input, shape index: {}]
  %s9 = inlined_call_operand.vmem [shape: f32[8,1], index: 9, kind: output, shape index: {}]
  %s10 = sld [smem:[#allocation0]]
  $region62: #{tpu_custom_call.1} parent=0
    _
  %s12 = ssub.s32 1, %s10
  %s13 = scalar_select 0, %s12, %s10
  %v14 = vstv %s8
  %15 = vst [vmem:[#allocation2] sm:$0x1] %v14
  $region1: #{tpu_custom_call.1} parent=0
    #allocation3 [shape = 'u8[4096]{0}', space=vmem, size = 0x1000, scoped, tag = 'input window, operand 0, single buffered']
    #allocation4 [shape = 's32[1]{0}', space=sflag, size = 0x4, scoped, tag = 'scoped memory for tpu_custom_call.1']
    #allocation5 [shape = 'u8[32768]{0}', space=vmem, size = 0x8000, scoped, tag = 'input window, operand 1, single buffered']
    #allocation6 [shape = 's32[1]{0}', space=sflag, size = 0x4, scoped, tag = 'scoped memory for tpu_custom_call.1']
    #allocation7 [shape = 'u8[32768]{0}', space=vmem, size = 0x8000, scoped, tag = 'input window, operand 3, single buffered']
    #allocation8 [shape = 'u8[32768]{0}', space=vmem, size = 0x8000, scoped, tag = 'input window, operand 5, single buffered']
    #allocation9 [shape = 's32[1]{0}', space=sflag, size = 0x4, scoped, tag = 'scoped memory for tpu_custom_call.1']
    %16 = vsyncpa [#allocation4], 0
    %17 = vsyncpa [#allocation6], 0
    %18 = vsyncpa [#allocation9], 0
    // Predicated region
    $region2: #{tpu_custom_call.1} parent=1 // pred_check
      _
    $region3: #{tpu_custom_call.1} parent=1 // pred_check_branch
      %20 = sbr.rel (0) target = $region5
    $region4: #{tpu_custom_call.1} parent=1 // pred_region
      %22 = vsyncadd [#allocation4], 0
      %s24 = sshll.u32 %s0, 4
      %s25 = int_to_ptr.hbm [resolvable:$true] %s24
      %s26 = sshll.u32 [#allocation3], 4
      %s27 = int_to_ptr.vmem [resolvable:$true] %s26
      %29 = dma.hbm_to_vmem [thread:$0]  %s25, 128, %s27, [#allocation4]
    $region5: #{tpu_custom_call.1} parent=1 // pred_fallthru
      _
    // Predicated region
    $region6: #{tpu_custom_call.1} parent=1 // pred_check
      _
    $region7: #{tpu_custom_call.1} parent=1 // pred_check_branch
      %31 = sbr.rel (0) target = $region9
    $region8: #{tpu_custom_call.1} parent=1 // pred_region
      %33 = vsyncadd [#allocation6], 0
      %s34 = sshll.u32 %s1, 4
      %s35 = int_to_ptr.hbm [resolvable:$true] %s34
      %s36 = sshll.u32 [#allocation5], 4
      %s37 = int_to_ptr.vmem [resolvable:$true] %s36
      %42 = dma.hbm_to_vmem [thread:$0]  %s35, 1024, %s37, [#allocation6], 64, 64, 4
    $region9: #{tpu_custom_call.1} parent=1 // pred_fallthru
      _
    // Predicated region
    $region10: #{tpu_custom_call.1} parent=1 // pred_check
      _
    $region11: #{tpu_custom_call.1} parent=1 // pred_check_branch
      %44 = sbr.rel (0) target = $region13
    $region12: #{tpu_custom_call.1} parent=1 // pred_region
      _
    $region13: #{tpu_custom_call.1} parent=1 // pred_fallthru
      _
    // Predicated region
    $region14: #{tpu_custom_call.1} parent=1 // pred_check
      _
    $region15: #{tpu_custom_call.1} parent=1 // pred_check_branch
      %46 = sbr.rel (0) target = $region17
    $region16: #{tpu_custom_call.1} parent=1 // pred_region
      %48 = vsyncadd [#allocation6], 0
      %s49 = sshll.u32 %s3, 4
      %s50 = int_to_ptr.hbm [resolvable:$true] %s49
      %s51 = sshll.u32 [#allocation7], 4
      %s52 = int_to_ptr.vmem [resolvable:$true] %s51
      %57 = dma.hbm_to_vmem [thread:$0]  %s50, 1024, %s52, [#allocation6], 64, 64, 4
    $region17: #{tpu_custom_call.1} parent=1 // pred_fallthru
      _
    // Predicated region
    $region18: #{tpu_custom_call.1} parent=1 // pred_check
      _
    $region19: #{tpu_custom_call.1} parent=1 // pred_check_branch
      %59 = sbr.rel (0) target = $region21
    $region20: #{tpu_custom_call.1} parent=1 // pred_region
      _
    $region21: #{tpu_custom_call.1} parent=1 // pred_fallthru
      _
    // Predicated region
    $region22: #{tpu_custom_call.1} parent=1 // pred_check
      _
    $region23: #{tpu_custom_call.1} parent=1 // pred_check_branch
      %61 = sbr.rel (0) target = $region25
    $region24: #{tpu_custom_call.1} parent=1 // pred_region
      %63 = vsyncadd [#allocation9], 0
      %s64 = sshll.u32 %s5, 4
      %s65 = int_to_ptr.hbm [resolvable:$true] %s64
      %s66 = sshll.u32 [#allocation8], 4
      %s67 = int_to_ptr.vmem [resolvable:$true] %s66
      %72 = dma.hbm_to_vmem [thread:$0]  %s65, 1024, %s67, [#allocation9], 64, 64, 4
    $region25: #{tpu_custom_call.1} parent=1 // pred_fallthru
      _
    // Predicated region
    $region26: #{tpu_custom_call.1} parent=1 // pred_check
      _
    $region27: #{tpu_custom_call.1} parent=1 // pred_check_branch
      %74 = sbr.rel (0) target = $region29
    $region28: #{tpu_custom_call.1} parent=1 // pred_region
      _
    $region29: #{tpu_custom_call.1} parent=1 // pred_fallthru
      _
    // Predicated region
    $region30: #{tpu_custom_call.1} parent=1 // pred_check
      _
    $region31: #{tpu_custom_call.1} parent=1 // pred_check_branch
      %76 = sbr.rel (0) target = $region33
    $region32: #{tpu_custom_call.1} parent=1 // pred_region
      _
    $region33: #{tpu_custom_call.1} parent=1 // pred_fallthru
      _
    // Predicated region
    $region34: #{tpu_custom_call.1} parent=1 // pred_check
      _
    $region35: #{tpu_custom_call.1} parent=1 // pred_check_branch
      %78 = sbr.rel (0) target = $region37
    $region36: #{tpu_custom_call.1} parent=1 // pred_region
      _
    $region37: #{tpu_custom_call.1} parent=1 // pred_fallthru
      _
    // Predicated region
    $region38: #{tpu_custom_call.1} parent=1 // pred_check
      _
    $region39: #{tpu_custom_call.1} parent=1 // pred_check_branch
      %80 = sbr.rel (0) target = $region41
    $region40: #{tpu_custom_call.1} parent=1 // pred_region
      %82 = dma.done [#allocation4], 128
    $region41: #{tpu_custom_call.1} parent=1 // pred_fallthru
      _
    // Predicated region
    $region42: #{tpu_custom_call.1} parent=1 // pred_check
      _
    $region43: #{tpu_custom_call.1} parent=1 // pred_check_branch
      %84 = sbr.rel (0) target = $region45
    $region44: #{tpu_custom_call.1} parent=1 // pred_region
      %86 = dma.done [#allocation6], 1024
    $region45: #{tpu_custom_call.1} parent=1 // pred_fallthru
      _
    // Predicated region
    $region46: #{tpu_custom_call.1} parent=1 // pred_check
      _
    $region47: #{tpu_custom_call.1} parent=1 // pred_check_branch
      %88 = sbr.rel (0) target = $region49
    $region48: #{tpu_custom_call.1} parent=1 // pred_region
      %90 = dma.done [#allocation6], 1024
    $region49: #{tpu_custom_call.1} parent=1 // pred_fallthru
      _
    // Predicated region
    $region50: #{tpu_custom_call.1} parent=1 // pred_check
      _
    $region51: #{tpu_custom_call.1} parent=1 // pred_check_branch
      %92 = sbr.rel (0) target = $region53
    $region52: #{tpu_custom_call.1} parent=1 // pred_region
      %94 = dma.done [#allocation9], 1024
    $region53: #{tpu_custom_call.1} parent=1 // pred_fallthru
      _
    %v95 = vld [vmem:[#allocation3] sm:$0xff]
    %v96 = vpack.c.bf16 %v95, %v95
    %v97 = vld [vmem:[#allocation5] sm:$0xf]
    %v98 = vld [vmem:[#allocation5 + $0x4] sm:$0xf]
    %v99 = vld [vmem:[#allocation5 + $0x8] sm:$0xf]
    %v100 = vld [vmem:[#allocation5 + $0xc] sm:$0xf]
    %v101 = vld [vmem:[#allocation5 + $0x10] sm:$0xf]
    %v102 = vld [vmem:[#allocation5 + $0x14] sm:$0xf]
    %v103 = vld [vmem:[#allocation5 + $0x18] sm:$0xf]
    %v104 = vld [vmem:[#allocation5 + $0x1c] sm:$0xf]
    %v105 = vld [vmem:[#allocation5 + $0x20] sm:$0xf]
    %v106 = vld [vmem:[#allocation5 + $0x24] sm:$0xf]
    %v107 = vld [vmem:[#allocation5 + $0x28] sm:$0xf]
    %v108 = vld [vmem:[#allocation5 + $0x2c] sm:$0xf]
    %v109 = vld [vmem:[#allocation5 + $0x30] sm:$0xf]
    %v110 = vld [vmem:[#allocation5 + $0x34] sm:$0xf]
    %v111 = vld [vmem:[#allocation5 + $0x38] sm:$0xf]
    %v112 = vld [vmem:[#allocation5 + $0x3c] sm:$0xf]
    %v113 = vld [vmem:[%s2] sm:$0x1]
    %v115 = vperm.slane %v113, 0
    %v133 = vunpack.c.l.b16 %v97
    %v134 = vunpack.c.l.b16 %v98
    %v135 = vunpack.c.l.b16 %v99
    %v136 = vunpack.c.l.b16 %v100
    %v137 = vunpack.c.l.b16 %v101
    %v138 = vunpack.c.l.b16 %v102
    %v139 = vunpack.c.l.b16 %v103
    %v140 = vunpack.c.l.b16 %v104
    %v141 = vunpack.c.l.b16 %v105
    %v142 = vunpack.c.l.b16 %v106
    %v143 = vunpack.c.l.b16 %v107
    %v144 = vunpack.c.l.b16 %v108
    %v145 = vunpack.c.l.b16 %v109
    %v146 = vunpack.c.l.b16 %v110
    %v147 = vunpack.c.l.b16 %v111
    %v148 = vunpack.c.l.b16 %v112
    %v149 = vpack.c.b16 %v134, %v133
    %v150 = vpack.c.b16 %v136, %v135
    %v151 = vpack.c.b16 %v138, %v137
    %v152 = vpack.c.b16 %v140, %v139
    %v153 = vpack.c.b16 %v142, %v141
    %v154 = vpack.c.b16 %v144, %v143
    %v155 = vpack.c.b16 %v146, %v145
    %v156 = vpack.c.b16 %v148, %v147
    %165 = vmatpush.bf16.msra.mxu0 %v156
    %166 = vmatpush.bf16.msra.mxu0 %v155
    %167 = vmatpush.bf16.msra.mxu0 %v154
    %168 = vmatpush.bf16.msra.mxu0 %v153
    %169 = vmatpush.bf16.msra.mxu0 %v152
    %170 = vmatpush.bf16.msra.mxu0 %v151
    %171 = vmatpush.bf16.msra.mxu0 %v150
    %172 = vmatpush.bf16.msra.mxu0 %v149
    %173 = vmatmul.bf16.gmra.mxu0 %v96
    %v174 = vpop.f32.mrf.mxu0
    %v175 = vadd.f32 %v115, %v174
    %v176 = vpop.f32.mrf.mxu0
    %177 = vdwg.mxu0
    %v178 = vmul.f32 %v175, 0.5
    %v179 = vtanh.pop %v178
    %v180 = vmul.f32 %v179, 0.5
    %v181 = vadd.f32 %v180, 0.5
    %v182 = vpack.c.bf16 %v181, %v181
    %v183 = vld [vmem:[#allocation7] sm:$0xf]
    %v184 = vld [vmem:[#allocation7 + $0x4] sm:$0xf]
    %v185 = vld [vmem:[#allocation7 + $0x8] sm:$0xf]
    %v186 = vld [vmem:[#allocation7 + $0xc] sm:$0xf]
    %v187 = vld [vmem:[#allocation7 + $0x10] sm:$0xf]
    %v188 = vld [vmem:[#allocation7 + $0x14] sm:$0xf]
    %v189 = vld [vmem:[#allocation7 + $0x18] sm:$0xf]
    %v190 = vld [vmem:[#allocation7 + $0x1c] sm:$0xf]
    %v191 = vld [vmem:[#allocation7 + $0x20] sm:$0xf]
    %v192 = vld [vmem:[#allocation7 + $0x24] sm:$0xf]
    %v193 = vld [vmem:[#allocation7 + $0x28] sm:$0xf]
    %v194 = vld [vmem:[#allocation7 + $0x2c] sm:$0xf]
    %v195 = vld [vmem:[#allocation7 + $0x30] sm:$0xf]
    %v196 = vld [vmem:[#allocation7 + $0x34] sm:$0xf]
    %v197 = vld [vmem:[#allocation7 + $0x38] sm:$0xf]
    %v198 = vld [vmem:[#allocation7 + $0x3c] sm:$0xf]
    %v199 = vld [vmem:[%s4] sm:$0x1]
    %v201 = vperm.slane %v199, 0
    %v219 = vunpack.c.l.b16 %v183
    %v220 = vunpack.c.l.b16 %v184
    %v221 = vunpack.c.l.b16 %v185
    %v222 = vunpack.c.l.b16 %v186
    %v223 = vunpack.c.l.b16 %v187
    %v224 = vunpack.c.l.b16 %v188
    %v225 = vunpack.c.l.b16 %v189
    %v226 = vunpack.c.l.b16 %v190
    %v227 = vunpack.c.l.b16 %v191
    %v228 = vunpack.c.l.b16 %v192
    %v229 = vunpack.c.l.b16 %v193
    %v230 = vunpack.c.l.b16 %v194
    %v231 = vunpack.c.l.b16 %v195
    %v232 = vunpack.c.l.b16 %v196
    %v233 = vunpack.c.l.b16 %v197
    %v234 = vunpack.c.l.b16 %v198
    %v235 = vpack.c.b16 %v220, %v219
    %v236 = vpack.c.b16 %v222, %v221
    %v237 = vpack.c.b16 %v224, %v223
    %v238 = vpack.c.b16 %v226, %v225
    %v239 = vpack.c.b16 %v228, %v227
    %v240 = vpack.c.b16 %v230, %v229
    %v241 = vpack.c.b16 %v232, %v231
    %v242 = vpack.c.b16 %v234, %v233
    %251 = vmatpush.bf16.msra.mxu0 %v242
    %252 = vmatpush.bf16.msra.mxu0 %v241
    %253 = vmatpush.bf16.msra.mxu0 %v240
    %254 = vmatpush.bf16.msra.mxu0 %v239
    %255 = vmatpush.bf16.msra.mxu0 %v238
    %256 = vmatpush.bf16.msra.mxu0 %v237
    %257 = vmatpush.bf16.msra.mxu0 %v236
    %258 = vmatpush.bf16.msra.mxu0 %v235
    %259 = vmatmul.bf16.gmra.mxu0 %v182
    %v260 = vpop.f32.mrf.mxu0
    %v261 = vadd.f32 %v201, %v260
    %v262 = vpop.f32.mrf.mxu0
    %263 = vdwg.mxu0
    %v264 = vmul.f32 %v261, 0.5
    %v265 = vtanh.pop %v264
    %v266 = vmul.f32 %v265, 0.5
    %v267 = vadd.f32 %v266, 0.5
    %v268 = vpack.c.bf16 %v267, %v267
    %v269 = vld [vmem:[#allocation8] sm:$0xf]
    %v270 = vld [vmem:[#allocation8 + $0x4] sm:$0xf]
    %v271 = vld [vmem:[#allocation8 + $0x8] sm:$0xf]
    %v272 = vld [vmem:[#allocation8 + $0xc] sm:$0xf]
    %v273 = vld [vmem:[#allocation8 + $0x10] sm:$0xf]
    %v274 = vld [vmem:[#allocation8 + $0x14] sm:$0xf]
    %v275 = vld [vmem:[#allocation8 + $0x18] sm:$0xf]
    %v276 = vld [vmem:[#allocation8 + $0x1c] sm:$0xf]
    %v277 = vld [vmem:[#allocation8 + $0x20] sm:$0xf]
    %v278 = vld [vmem:[#allocation8 + $0x24] sm:$0xf]
    %v279 = vld [vmem:[#allocation8 + $0x28] sm:$0xf]
    %v280 = vld [vmem:[#allocation8 + $0x2c] sm:$0xf]
    %v281 = vld [vmem:[#allocation8 + $0x30] sm:$0xf]
    %v282 = vld [vmem:[#allocation8 + $0x34] sm:$0xf]
    %v283 = vld [vmem:[#allocation8 + $0x38] sm:$0xf]
    %v284 = vld [vmem:[#allocation8 + $0x3c] sm:$0xf]
    %v285 = vld [vmem:[%s6] sm:$0x1]
    %v287 = vperm.slane %v285, 0
    %v305 = vunpack.c.l.b16 %v269
    %v306 = vunpack.c.l.b16 %v270
    %v307 = vunpack.c.l.b16 %v271
    %v308 = vunpack.c.l.b16 %v272
    %v309 = vunpack.c.l.b16 %v273
    %v310 = vunpack.c.l.b16 %v274
    %v311 = vunpack.c.l.b16 %v275
    %v312 = vunpack.c.l.b16 %v276
    %v313 = vunpack.c.l.b16 %v277
    %v314 = vunpack.c.l.b16 %v278
    %v315 = vunpack.c.l.b16 %v279
    %v316 = vunpack.c.l.b16 %v280
    %v317 = vunpack.c.l.b16 %v281
    %v318 = vunpack.c.l.b16 %v282
    %v319 = vunpack.c.l.b16 %v283
    %v320 = vunpack.c.l.b16 %v284
    %v321 = vpack.c.b16 %v306, %v305
    %v322 = vpack.c.b16 %v308, %v307
    %v323 = vpack.c.b16 %v310, %v309
    %v324 = vpack.c.b16 %v312, %v311
    %v325 = vpack.c.b16 %v314, %v313
    %v326 = vpack.c.b16 %v316, %v315
    %v327 = vpack.c.b16 %v318, %v317
    %v328 = vpack.c.b16 %v320, %v319
    %337 = vmatpush.bf16.msra.mxu0 %v328
    %338 = vmatpush.bf16.msra.mxu0 %v327
    %339 = vmatpush.bf16.msra.mxu0 %v326
    %340 = vmatpush.bf16.msra.mxu0 %v325
    %341 = vmatpush.bf16.msra.mxu0 %v324
    %342 = vmatpush.bf16.msra.mxu0 %v323
    %343 = vmatpush.bf16.msra.mxu0 %v322
    %344 = vmatpush.bf16.msra.mxu0 %v321
    %345 = vmatmul.bf16.gmra.mxu0 %v268
    %v346 = vpop.f32.mrf.mxu0
    %v347 = vadd.f32 %v287, %v346
    %v348 = vpop.f32.mrf.mxu0
    %349 = vdwg.mxu0
    %v350 = vmul.f32 %v347, 0.5
    %v351 = vtanh.pop %v350
    %v352 = vmul.f32 %v351, 0.5
    %v353 = vadd.f32 %v352, 0.5
    %v354 = vpack.c.bf16 %v353, %v353
    %v355 = vld [vmem:[%s7] sm:$0x1]
    %v356 = vunpack.c.l.bf16 %v354
    %v358 = vperm.slane %v355, 0
    %v360 = vmul.f32 %v356, %v358
    %361 = vadd.xlane.f32.xlu0 %v360
    %v362 = vpop.xlane.xlu0 %361
    %v363 = vld [vmem:[#allocation2] sm:$0x1]
    %v365 = vperm.slane %v363, 0
    %v367 = vadd.f32 %v362, %v365
    %v368 = vtanh.pop %v367
    %v369 = vmul.f32 %v368, 3.0
    %vm370 = vcmask 7168
    %371 = vst.msk [vmem:[%s9] sm:$0xff] %vm370, %v369
    // Predicated region
    $region54: #{tpu_custom_call.1} parent=1 // pred_check
      _
    $region55: #{tpu_custom_call.1} parent=1 // pred_check_branch
      %373 = sbr.rel (0) target = $region57
    $region56: #{tpu_custom_call.1} parent=1 // pred_region
      _
    $region57: #{tpu_custom_call.1} parent=1 // pred_fallthru
      _
    // Predicated region
    $region58: #{tpu_custom_call.1} parent=1 // pred_check
      _
    $region59: #{tpu_custom_call.1} parent=1 // pred_check_branch
      %375 = sbr.rel (0) target = $region61
    $region60: #{tpu_custom_call.1} parent=1 // pred_region
      _
    $region61: #{tpu_custom_call.1} parent=1 // pred_fallthru
      _
    %376 = vsyncpa [#allocation4], 1
    %377 = vsyncpa [#allocation6], 1
    %378 = vsyncpa [#allocation9], 1

// kernel: tpu_custom_call.1
$region0: #{tpu_custom_call.1}
  #allocation0 [shape = 'u32[]', space=smem, size = 0x4, offset = 0x4, fixed_abs, tag = 'smem constant byte address 0x4 - core index']
  #allocation1 [shape = 'u32[72,128]{1,0:T(1,128)}', space=vmem, size = 0x9000, scoped, tag = 'internal scratch']
  #allocation2 [shape = 'f32[1,1]{1,0:T(1,128)S(1)}', space=vmem, size = 0x200, scoped, tag = 'scoped memory for tpu_custom_call.1']
  %s0 = inlined_call_operand.hbm [shape: f32[8,128], index: 0, kind: input, shape index: {}]
  %s1 = inlined_call_operand.hbm [shape: bf16[128,128], index: 1, kind: input, shape index: {}]
  %s2 = inlined_call_operand.vmem [shape: f32[1,128], index: 2, kind: input, shape index: {}]
  %s3 = inlined_call_operand.hbm [shape: bf16[128,128], index: 3, kind: input, shape index: {}]
  %s4 = inlined_call_operand.vmem [shape: f32[1,128], index: 4, kind: input, shape index: {}]
  %s5 = inlined_call_operand.hbm [shape: bf16[128,128], index: 5, kind: input, shape index: {}]
  %s6 = inlined_call_operand.vmem [shape: f32[1,128], index: 6, kind: input, shape index: {}]
  %s7 = inlined_call_operand.vmem [shape: f32[1,128], index: 7, kind: input, shape index: {}]
  %s8 = inlined_call_operand.<no memory space> [shape: f32[1,1], index: 8, kind: input, shape index: {}]
  %s9 = inlined_call_operand.vmem [shape: f32[8,1], index: 9, kind: output, shape index: {}]
  %s10 = sld [smem:[#allocation0]]
  $region62: #{tpu_custom_call.1} parent=0
    _
  %s12 = ssub.s32 1, %s10
  %s13 = scalar_select 0, %s12, %s10
  %v14 = vstv %s8
  %15 = vst [vmem:[#allocation2] sm:$0x1] %v14
  $region1: #{tpu_custom_call.1} parent=0
    #allocation3 [shape = 'u8[4096]{0}', space=vmem, size = 0x1000, scoped, tag = 'input window, operand 0, single buffered']
    #allocation4 [shape = 's32[1]{0}', space=sflag, size = 0x4, scoped, tag = 'scoped memory for tpu_custom_call.1']
    #allocation5 [shape = 'u8[32768]{0}', space=vmem, size = 0x8000, scoped, tag = 'input window, operand 1, single buffered']
    #allocation6 [shape = 's32[1]{0}', space=sflag, size = 0x4, scoped, tag = 'scoped memory for tpu_custom_call.1']
    #allocation7 [shape = 'u8[32768]{0}', space=vmem, size = 0x8000, scoped, tag = 'input window, operand 3, single buffered']
    #allocation8 [shape = 'u8[32768]{0}', space=vmem, size = 0x8000, scoped, tag = 'input window, operand 5, single buffered']
    #allocation9 [shape = 's32[1]{0}', space=sflag, size = 0x4, scoped, tag = 'scoped memory for tpu_custom_call.1']
    %16 = vsyncpa [#allocation4], 0
    %17 = vsyncpa [#allocation6], 0
    %18 = vsyncpa [#allocation9], 0
    // Predicated region
    $region2: #{tpu_custom_call.1} parent=1 // pred_check
      _
    $region3: #{tpu_custom_call.1} parent=1 // pred_check_branch
      %20 = sbr.rel (0) target = $region5
    $region4: #{tpu_custom_call.1} parent=1 // pred_region
      %22 = vsyncadd [#allocation4], 0
      %s24 = sshll.u32 %s0, 4
      %s25 = int_to_ptr.hbm [resolvable:$true] %s24
      %s26 = sshll.u32 [#allocation3], 4
      %s27 = int_to_ptr.vmem [resolvable:$true] %s26
      %29 = dma.hbm_to_vmem [thread:$0]  %s25, 128, %s27, [#allocation4]
    $region5: #{tpu_custom_call.1} parent=1 // pred_fallthru
      _
    // Predicated region
    $region6: #{tpu_custom_call.1} parent=1 // pred_check
      _
    $region7: #{tpu_custom_call.1} parent=1 // pred_check_branch
      %31 = sbr.rel (0) target = $region9
    $region8: #{tpu_custom_call.1} parent=1 // pred_region
      %33 = vsyncadd [#allocation6], 0
      %s34 = sshll.u32 %s1, 4
      %s35 = int_to_ptr.hbm [resolvable:$true] %s34
      %s36 = sshll.u32 [#allocation5], 4
      %s37 = int_to_ptr.vmem [resolvable:$true] %s36
      %42 = dma.hbm_to_vmem [thread:$0]  %s35, 1024, %s37, [#allocation6], 64, 64, 4
    $region9: #{tpu_custom_call.1} parent=1 // pred_fallthru
      _
    // Predicated region
    $region10: #{tpu_custom_call.1} parent=1 // pred_check
      _
    $region11: #{tpu_custom_call.1} parent=1 // pred_check_branch
      %44 = sbr.rel (0) target = $region13
    $region12: #{tpu_custom_call.1} parent=1 // pred_region
      _
    $region13: #{tpu_custom_call.1} parent=1 // pred_fallthru
      _
    // Predicated region
    $region14: #{tpu_custom_call.1} parent=1 // pred_check
      _
    $region15: #{tpu_custom_call.1} parent=1 // pred_check_branch
      %46 = sbr.rel (0) target = $region17
    $region16: #{tpu_custom_call.1} parent=1 // pred_region
      %48 = vsyncadd [#allocation6], 0
      %s49 = sshll.u32 %s3, 4
      %s50 = int_to_ptr.hbm [resolvable:$true] %s49
      %s51 = sshll.u32 [#allocation7], 4
      %s52 = int_to_ptr.vmem [resolvable:$true] %s51
      %57 = dma.hbm_to_vmem [thread:$0]  %s50, 1024, %s52, [#allocation6], 64, 64, 4
    $region17: #{tpu_custom_call.1} parent=1 // pred_fallthru
      _
    // Predicated region
    $region18: #{tpu_custom_call.1} parent=1 // pred_check
      _
    $region19: #{tpu_custom_call.1} parent=1 // pred_check_branch
      %59 = sbr.rel (0) target = $region21
    $region20: #{tpu_custom_call.1} parent=1 // pred_region
      _
    $region21: #{tpu_custom_call.1} parent=1 // pred_fallthru
      _
    // Predicated region
    $region22: #{tpu_custom_call.1} parent=1 // pred_check
      _
    $region23: #{tpu_custom_call.1} parent=1 // pred_check_branch
      %61 = sbr.rel (0) target = $region25
    $region24: #{tpu_custom_call.1} parent=1 // pred_region
      %63 = vsyncadd [#allocation9], 0
      %s64 = sshll.u32 %s5, 4
      %s65 = int_to_ptr.hbm [resolvable:$true] %s64
      %s66 = sshll.u32 [#allocation8], 4
      %s67 = int_to_ptr.vmem [resolvable:$true] %s66
      %72 = dma.hbm_to_vmem [thread:$0]  %s65, 1024, %s67, [#allocation9], 64, 64, 4
    $region25: #{tpu_custom_call.1} parent=1 // pred_fallthru
      _
    // Predicated region
    $region26: #{tpu_custom_call.1} parent=1 // pred_check
      _
    $region27: #{tpu_custom_call.1} parent=1 // pred_check_branch
      %74 = sbr.rel (0) target = $region29
    $region28: #{tpu_custom_call.1} parent=1 // pred_region
      _
    $region29: #{tpu_custom_call.1} parent=1 // pred_fallthru
      _
    // Predicated region
    $region30: #{tpu_custom_call.1} parent=1 // pred_check
      _
    $region31: #{tpu_custom_call.1} parent=1 // pred_check_branch
      %76 = sbr.rel (0) target = $region33
    $region32: #{tpu_custom_call.1} parent=1 // pred_region
      _
    $region33: #{tpu_custom_call.1} parent=1 // pred_fallthru
      _
    // Predicated region
    $region34: #{tpu_custom_call.1} parent=1 // pred_check
      _
    $region35: #{tpu_custom_call.1} parent=1 // pred_check_branch
      %78 = sbr.rel (0) target = $region37
    $region36: #{tpu_custom_call.1} parent=1 // pred_region
      _
    $region37: #{tpu_custom_call.1} parent=1 // pred_fallthru
      _
    // Predicated region
    $region38: #{tpu_custom_call.1} parent=1 // pred_check
      _
    $region39: #{tpu_custom_call.1} parent=1 // pred_check_branch
      %80 = sbr.rel (0) target = $region41
    $region40: #{tpu_custom_call.1} parent=1 // pred_region
      %82 = dma.done [#allocation4], 128
    $region41: #{tpu_custom_call.1} parent=1 // pred_fallthru
      _
    // Predicated region
    $region42: #{tpu_custom_call.1} parent=1 // pred_check
      _
    $region43: #{tpu_custom_call.1} parent=1 // pred_check_branch
      %84 = sbr.rel (0) target = $region45
    $region44: #{tpu_custom_call.1} parent=1 // pred_region
      %86 = dma.done [#allocation6], 1024
    $region45: #{tpu_custom_call.1} parent=1 // pred_fallthru
      _
    // Predicated region
    $region46: #{tpu_custom_call.1} parent=1 // pred_check
      _
    $region47: #{tpu_custom_call.1} parent=1 // pred_check_branch
      %88 = sbr.rel (0) target = $region49
    $region48: #{tpu_custom_call.1} parent=1 // pred_region
      %90 = dma.done [#allocation6], 1024
    $region49: #{tpu_custom_call.1} parent=1 // pred_fallthru
      _
    // Predicated region
    $region50: #{tpu_custom_call.1} parent=1 // pred_check
      _
    $region51: #{tpu_custom_call.1} parent=1 // pred_check_branch
      %92 = sbr.rel (0) target = $region53
    $region52: #{tpu_custom_call.1} parent=1 // pred_region
      %94 = dma.done [#allocation9], 1024
    $region53: #{tpu_custom_call.1} parent=1 // pred_fallthru
      _
    %v95 = vld [vmem:[#allocation3] sm:$0xff]
    %v96 = vpack.c.bf16 %v95, %v95
    %v97 = vld [vmem:[#allocation5] sm:$0xf]
    %v98 = vld [vmem:[#allocation5 + $0x4] sm:$0xf]
    %v99 = vld [vmem:[#allocation5 + $0x8] sm:$0xf]
    %v100 = vld [vmem:[#allocation5 + $0xc] sm:$0xf]
    %v101 = vld [vmem:[#allocation5 + $0x10] sm:$0xf]
    %v102 = vld [vmem:[#allocation5 + $0x14] sm:$0xf]
    %v103 = vld [vmem:[#allocation5 + $0x18] sm:$0xf]
    %v104 = vld [vmem:[#allocation5 + $0x1c] sm:$0xf]
    %v105 = vld [vmem:[#allocation5 + $0x20] sm:$0xf]
    %v106 = vld [vmem:[#allocation5 + $0x24] sm:$0xf]
    %v107 = vld [vmem:[#allocation5 + $0x28] sm:$0xf]
    %v108 = vld [vmem:[#allocation5 + $0x2c] sm:$0xf]
    %v109 = vld [vmem:[#allocation5 + $0x30] sm:$0xf]
    %v110 = vld [vmem:[#allocation5 + $0x34] sm:$0xf]
    %v111 = vld [vmem:[#allocation5 + $0x38] sm:$0xf]
    %v112 = vld [vmem:[#allocation5 + $0x3c] sm:$0xf]
    %v113 = vld [vmem:[%s2] sm:$0x1]
    %v115 = vperm.slane %v113, 0
    %v133 = vunpack.c.l.b16 %v97
    %v134 = vunpack.c.l.b16 %v98
    %v135 = vunpack.c.l.b16 %v99
    %v136 = vunpack.c.l.b16 %v100
    %v137 = vunpack.c.l.b16 %v101
    %v138 = vunpack.c.l.b16 %v102
    %v139 = vunpack.c.l.b16 %v103
    %v140 = vunpack.c.l.b16 %v104
    %v141 = vunpack.c.l.b16 %v105
    %v142 = vunpack.c.l.b16 %v106
    %v143 = vunpack.c.l.b16 %v107
    %v144 = vunpack.c.l.b16 %v108
    %v145 = vunpack.c.l.b16 %v109
    %v146 = vunpack.c.l.b16 %v110
    %v147 = vunpack.c.l.b16 %v111
    %v148 = vunpack.c.l.b16 %v112
    %v149 = vpack.c.b16 %v134, %v133
    %v150 = vpack.c.b16 %v136, %v135
    %v151 = vpack.c.b16 %v138, %v137
    %v152 = vpack.c.b16 %v140, %v139
    %v153 = vpack.c.b16 %v142, %v141
    %v154 = vpack.c.b16 %v144, %v143
    %v155 = vpack.c.b16 %v146, %v145
    %v156 = vpack.c.b16 %v148, %v147
    %165 = vmatpush.bf16.msra.mxu0 %v156
    %166 = vmatpush.bf16.msra.mxu0 %v155
    %167 = vmatpush.bf16.msra.mxu0 %v154
    %168 = vmatpush.bf16.msra.mxu0 %v153
    %169 = vmatpush.bf16.msra.mxu0 %v152
    %170 = vmatpush.bf16.msra.mxu0 %v151
    %171 = vmatpush.bf16.msra.mxu0 %v150
    %172 = vmatpush.bf16.msra.mxu0 %v149
    %173 = vmatmul.bf16.gmra.mxu0 %v96
    %v174 = vpop.f32.mrf.mxu0
    %v175 = vadd.f32 %v115, %v174
    %v176 = vpop.f32.mrf.mxu0
    %177 = vdwg.mxu0
    %v178 = vmul.f32 %v175, 0.5
    %v179 = vtanh.pop %v178
    %v180 = vmul.f32 %v179, 0.5
    %v181 = vadd.f32 %v180, 0.5
    %v182 = vpack.c.bf16 %v181, %v181
    %v183 = vld [vmem:[#allocation7] sm:$0xf]
    %v184 = vld [vmem:[#allocation7 + $0x4] sm:$0xf]
    %v185 = vld [vmem:[#allocation7 + $0x8] sm:$0xf]
    %v186 = vld [vmem:[#allocation7 + $0xc] sm:$0xf]
    %v187 = vld [vmem:[#allocation7 + $0x10] sm:$0xf]
    %v188 = vld [vmem:[#allocation7 + $0x14] sm:$0xf]
    %v189 = vld [vmem:[#allocation7 + $0x18] sm:$0xf]
    %v190 = vld [vmem:[#allocation7 + $0x1c] sm:$0xf]
    %v191 = vld [vmem:[#allocation7 + $0x20] sm:$0xf]
    %v192 = vld [vmem:[#allocation7 + $0x24] sm:$0xf]
    %v193 = vld [vmem:[#allocation7 + $0x28] sm:$0xf]
    %v194 = vld [vmem:[#allocation7 + $0x2c] sm:$0xf]
    %v195 = vld [vmem:[#allocation7 + $0x30] sm:$0xf]
    %v196 = vld [vmem:[#allocation7 + $0x34] sm:$0xf]
    %v197 = vld [vmem:[#allocation7 + $0x38] sm:$0xf]
    %v198 = vld [vmem:[#allocation7 + $0x3c] sm:$0xf]
    %v199 = vld [vmem:[%s4] sm:$0x1]
    %v201 = vperm.slane %v199, 0
    %v219 = vunpack.c.l.b16 %v183
    %v220 = vunpack.c.l.b16 %v184
    %v221 = vunpack.c.l.b16 %v185
    %v222 = vunpack.c.l.b16 %v186
    %v223 = vunpack.c.l.b16 %v187
    %v224 = vunpack.c.l.b16 %v188
    %v225 = vunpack.c.l.b16 %v189
    %v226 = vunpack.c.l.b16 %v190
    %v227 = vunpack.c.l.b16 %v191
    %v228 = vunpack.c.l.b16 %v192
    %v229 = vunpack.c.l.b16 %v193
    %v230 = vunpack.c.l.b16 %v194
    %v231 = vunpack.c.l.b16 %v195
    %v232 = vunpack.c.l.b16 %v196
    %v233 = vunpack.c.l.b16 %v197
    %v234 = vunpack.c.l.b16 %v198
    %v235 = vpack.c.b16 %v220, %v219
    %v236 = vpack.c.b16 %v222, %v221
    %v237 = vpack.c.b16 %v224, %v223
    %v238 = vpack.c.b16 %v226, %v225
    %v239 = vpack.c.b16 %v228, %v227
    %v240 = vpack.c.b16 %v230, %v229
    %v241 = vpack.c.b16 %v232, %v231
    %v242 = vpack.c.b16 %v234, %v233
    %251 = vmatpush.bf16.msra.mxu0 %v242
    %252 = vmatpush.bf16.msra.mxu0 %v241
    %253 = vmatpush.bf16.msra.mxu0 %v240
    %254 = vmatpush.bf16.msra.mxu0 %v239
    %255 = vmatpush.bf16.msra.mxu0 %v238
    %256 = vmatpush.bf16.msra.mxu0 %v237
    %257 = vmatpush.bf16.msra.mxu0 %v236
    %258 = vmatpush.bf16.msra.mxu0 %v235
    %259 = vmatmul.bf16.gmra.mxu0 %v182
    %v260 = vpop.f32.mrf.mxu0
    %v261 = vadd.f32 %v201, %v260
    %v262 = vpop.f32.mrf.mxu0
    %263 = vdwg.mxu0
    %v264 = vmul.f32 %v261, 0.5
    %v265 = vtanh.pop %v264
    %v266 = vmul.f32 %v265, 0.5
    %v267 = vadd.f32 %v266, 0.5
    %v268 = vpack.c.bf16 %v267, %v267
    %v269 = vld [vmem:[#allocation8] sm:$0xf]
    %v270 = vld [vmem:[#allocation8 + $0x4] sm:$0xf]
    %v271 = vld [vmem:[#allocation8 + $0x8] sm:$0xf]
    %v272 = vld [vmem:[#allocation8 + $0xc] sm:$0xf]
    %v273 = vld [vmem:[#allocation8 + $0x10] sm:$0xf]
    %v274 = vld [vmem:[#allocation8 + $0x14] sm:$0xf]
    %v275 = vld [vmem:[#allocation8 + $0x18] sm:$0xf]
    %v276 = vld [vmem:[#allocation8 + $0x1c] sm:$0xf]
    %v277 = vld [vmem:[#allocation8 + $0x20] sm:$0xf]
    %v278 = vld [vmem:[#allocation8 + $0x24] sm:$0xf]
    %v279 = vld [vmem:[#allocation8 + $0x28] sm:$0xf]
    %v280 = vld [vmem:[#allocation8 + $0x2c] sm:$0xf]
    %v281 = vld [vmem:[#allocation8 + $0x30] sm:$0xf]
    %v282 = vld [vmem:[#allocation8 + $0x34] sm:$0xf]
    %v283 = vld [vmem:[#allocation8 + $0x38] sm:$0xf]
    %v284 = vld [vmem:[#allocation8 + $0x3c] sm:$0xf]
    %v285 = vld [vmem:[%s6] sm:$0x1]
    %v287 = vperm.slane %v285, 0
    %v305 = vunpack.c.l.b16 %v269
    %v306 = vunpack.c.l.b16 %v270
    %v307 = vunpack.c.l.b16 %v271
    %v308 = vunpack.c.l.b16 %v272
    %v309 = vunpack.c.l.b16 %v273
    %v310 = vunpack.c.l.b16 %v274
    %v311 = vunpack.c.l.b16 %v275
    %v312 = vunpack.c.l.b16 %v276
    %v313 = vunpack.c.l.b16 %v277
    %v314 = vunpack.c.l.b16 %v278
    %v315 = vunpack.c.l.b16 %v279
    %v316 = vunpack.c.l.b16 %v280
    %v317 = vunpack.c.l.b16 %v281
    %v318 = vunpack.c.l.b16 %v282
    %v319 = vunpack.c.l.b16 %v283
    %v320 = vunpack.c.l.b16 %v284
    %v321 = vpack.c.b16 %v306, %v305
    %v322 = vpack.c.b16 %v308, %v307
    %v323 = vpack.c.b16 %v310, %v309
    %v324 = vpack.c.b16 %v312, %v311
    %v325 = vpack.c.b16 %v314, %v313
    %v326 = vpack.c.b16 %v316, %v315
    %v327 = vpack.c.b16 %v318, %v317
    %v328 = vpack.c.b16 %v320, %v319
    %337 = vmatpush.bf16.msra.mxu0 %v328
    %338 = vmatpush.bf16.msra.mxu0 %v327
    %339 = vmatpush.bf16.msra.mxu0 %v326
    %340 = vmatpush.bf16.msra.mxu0 %v325
    %341 = vmatpush.bf16.msra.mxu0 %v324
    %342 = vmatpush.bf16.msra.mxu0 %v323
    %343 = vmatpush.bf16.msra.mxu0 %v322
    %344 = vmatpush.bf16.msra.mxu0 %v321
    %345 = vmatmul.bf16.gmra.mxu0 %v268
    %v346 = vpop.f32.mrf.mxu0
    %v347 = vadd.f32 %v287, %v346
    %v348 = vpop.f32.mrf.mxu0
    %349 = vdwg.mxu0
    %v350 = vmul.f32 %v347, 0.5
    %v351 = vtanh.pop %v350
    %v352 = vmul.f32 %v351, 0.5
    %v353 = vadd.f32 %v352, 0.5
    %v354 = vpack.c.bf16 %v353, %v353
    %v355 = vld [vmem:[%s7] sm:$0x1]
    %v356 = vunpack.c.l.bf16 %v354
    %v358 = vperm.slane %v355, 0
    %v360 = vmul.f32 %v356, %v358
    %361 = vadd.xlane.f32.xlu0 %v360
    %v362 = vpop.xlane.xlu0 %361
    %v363 = vld [vmem:[#allocation2] sm:$0x1]
    %v365 = vperm.slane %v363, 0
    %v367 = vadd.f32 %v362, %v365
    %v368 = vtanh.pop %v367
    %v369 = vmul.f32 %v368, 3.0
    %vm370 = vcmask 7168
    %371 = vst.msk [vmem:[%s9] sm:$0xff] %vm370, %v369
    // Predicated region
    $region54: #{tpu_custom_call.1} parent=1 // pred_check
      _
    $region55: #{tpu_custom_call.1} parent=1 // pred_check_branch
      %373 = sbr.rel (0) target = $region57
    $region56: #{tpu_custom_call.1} parent=1 // pred_region
      _
    $region57: #{tpu_custom_call.1} parent=1 // pred_fallthru
      _
    // Predicated region
    $region58: #{tpu_custom_call.1} parent=1 // pred_check
      _
    $region59: #{tpu_custom_call.1} parent=1 // pred_check_branch
      %375 = sbr.rel (0) target = $region61
    $region60: #{tpu_custom_call.1} parent=1 // pred_region
      _
    $region61: #{tpu_custom_call.1} parent=1 // pred_fallthru
      _
    %376 = vsyncpa [#allocation4], 1
    %377 = vsyncpa [#allocation6], 1
    %378 = vsyncpa [#allocation9], 1

</llo_original>
